<compile_context>
chip_gen: v7x
topology: tpu7x:2x2x1
jax: 0.10.0
libtpu: 0.0.40
codegen_flags: <defaults>
</compile_context>

<pallas_src>
import functools

import jax
import jax.numpy as jnp
from jax import lax
from jax.experimental import pallas as pl
from jax.experimental.pallas import tpu as pltpu

EPS = 1e-5
_ROW_TILE_TARGET = 1024   # rows per grid step (multiple of 8); ~512 KiB f32 @ 128 lanes
_LANE_WIDTH = 128


def _stats_kernel(x_ref, sum_ref, sq_ref, *, tiles_per_core, row_tile, valid_rows,
                  need_mask):
    """Accumulate per-lane sum / sum-of-squares over row tiles.

    Outputs are (1, 8, W) accumulator blocks resident in VMEM across the inner
    ("arbitrary") grid axis; the final 8-sublane / cross-core / packed-group
    fold happens in the wrapper with tiny jnp ops.
    """
    i = pl.program_id(1)

    @pl.when(i == 0)
    def _():
        sum_ref[...] = jnp.zeros_like(sum_ref)
        sq_ref[...] = jnp.zeros_like(sq_ref)

    xb = x_ref[...].astype(jnp.float32)                 # (row_tile, W)

    if need_mask:
        # Global tile index; rows beyond valid_rows (including fully
        # out-of-range tiles whose block index was clamped in the index_map)
        # are zeroed before accumulation.  Pallas does NOT zero-pad OOB reads.
        g = pl.program_id(0) * tiles_per_core + i
        row0 = g * row_tile
        rows = lax.broadcasted_iota(jnp.int32, xb.shape, 0) + row0
        xb = jnp.where(rows < valid_rows, xb, 0.0)

    r, w = xb.shape
    pad = (-r) % 8
    if pad:                                             # tiny-input fallback only
        xb = jnp.concatenate([xb, jnp.zeros((pad, w), xb.dtype)], axis=0)
    grp = xb.reshape(-1, 8, w)                          # VPU adds across vreg rows
    sum_ref[...] += grp.sum(axis=0)[None]
    sq_ref[...] += (grp * grp).sum(axis=0)[None]


def _normalize_kernel(x_ref, scale_ref, shift_ref, o_ref):
    # Pure elementwise FMA: all stats math was hoisted into the wrapper.
    xb = x_ref[...].astype(jnp.float32)
    o_ref[...] = (xb * scale_ref[...] + shift_ref[...]).astype(o_ref.dtype)


def batch_norm_node(x, gamma, beta):
    """BatchNormNode forward. x: (B, N, C, H); gamma/beta: (H,). Returns (B, N, C, H)."""
    B, N, C, H = x.shape
    M = B * N * C

    # --- Lane-dense packing: fold P consecutive rows into the 128-lane axis. ---
    if H <= _LANE_WIDTH and _LANE_WIDTH % H == 0 and M % (_LANE_WIDTH // H) == 0:
        P = _LANE_WIDTH // H
    else:
        P = 1
    W = P * H
    Mp = M // P
    x2 = x.reshape(Mp, W)

    # --- Row tiling. ---
    if Mp <= _ROW_TILE_TARGET:
        row_tile = Mp                       # single full-array block
        num_tiles = 1
    else:
        row_tile = _ROW_TILE_TARGET         # multiple of 8, ~512 KiB f32 block
        num_tiles = pl.cdiv(Mp, row_tile)

    NC = 2 if num_tiles >= 2 else 1         # shard stats across 2 TCs (v7x)
    TPC = pl.cdiv(num_tiles, NC)            # tiles per core (inner grid extent)
    need_mask = (Mp % row_tile != 0) or (NC * TPC != num_tiles)

    if NC * TPC == num_tiles:
        x_stats_idx = lambda c, i: (c * TPC + i, 0)
    else:
        # Clamp fully out-of-range tiles onto the last real block; their
        # contribution is zeroed by the in-kernel row mask.
        x_stats_idx = lambda c, i: (jnp.minimum(c * TPC + i, num_tiles - 1), 0)

    # --- Pass 1: per-lane sum / sumsq partials, accumulator resident in VMEM. ---
    sums, sqs = pl.pallas_call(
        functools.partial(_stats_kernel, tiles_per_core=TPC, row_tile=row_tile,
                          valid_rows=Mp, need_mask=need_mask),
        out_shape=(jax.ShapeDtypeStruct((NC, 8, W), jnp.float32),
                   jax.ShapeDtypeStruct((NC, 8, W), jnp.float32)),
        grid_spec=pltpu.PrefetchScalarGridSpec(
            num_scalar_prefetch=0,
            grid=(NC, TPC),
            in_specs=[pl.BlockSpec((row_tile, W), x_stats_idx)],
            out_specs=(pl.BlockSpec((1, 8, W), lambda c, i: (c, 0, 0)),
                       pl.BlockSpec((1, 8, W), lambda c, i: (c, 0, 0)))),
        compiler_params=pltpu.CompilerParams(
            dimension_semantics=("parallel", "arbitrary")),
    )(x2)

    # --- Fold partials and compute per-channel affine once (tiny jnp ops). ---
    cnt = jnp.float32(M)
    tot_sum = sums.reshape(-1, P, H).sum(axis=(0, 1))   # (H,)
    tot_sq = sqs.reshape(-1, P, H).sum(axis=(0, 1))     # (H,)
    mean = tot_sum / cnt
    var = jnp.maximum(tot_sq / cnt - mean * mean, 0.0)  # biased var (PyTorch BN)
    # TODO(synk): E[x^2]-E[x]^2 in f32 can lose precision when |mean| >> std; an
    # exact centered second pass over x would cost one more full HBM sweep.
    inv = lax.rsqrt(var + EPS)
    scale_h = gamma.astype(jnp.float32) * inv           # (H,)
    shift_h = beta.astype(jnp.float32) - mean * scale_h # (H,)
    scale = jnp.tile(scale_h, P).reshape(1, W)          # lane layout: p*H + h
    shift = jnp.tile(shift_h, P).reshape(1, W)

    # --- Pass 2: elementwise normalize + affine (lane-dense stores). ---
    out2 = pl.pallas_call(
        _normalize_kernel,
        out_shape=jax.ShapeDtypeStruct((Mp, W), x.dtype),
        grid_spec=pltpu.PrefetchScalarGridSpec(
            num_scalar_prefetch=0,
            grid=(num_tiles,),
            in_specs=[pl.BlockSpec((row_tile, W), lambda i: (i, 0)),
                      pl.BlockSpec((1, W), lambda i: (0, 0)),
                      pl.BlockSpec((1, W), lambda i: (0, 0))],
            out_specs=pl.BlockSpec((row_tile, W), lambda i: (i, 0))),
        compiler_params=pltpu.CompilerParams(
            dimension_semantics=("parallel",)),
    )(x2, scale, shift)

    return out2.reshape(B, N, C, H)


def _reference(x, gamma, beta):
    xf = x.astype(jnp.float32)
    mean = jnp.mean(xf, axis=(0, 1, 2), keepdims=True)
    var = jnp.mean((xf - mean) ** 2, axis=(0, 1, 2), keepdims=True)  # biased
    xn = (xf - mean) * lax.rsqrt(var + EPS)
    return (xn * gamma.reshape(1, 1, 1, -1) + beta.reshape(1, 1, 1, -1)).astype(x.dtype)


if __name__ == "__main__":
    B, N, C, H = 2, 8, 4, 32  # batch, num_nodes, num_commodities, hidden_dim

    key = jax.random.PRNGKey(0)
    kx, kg, kb = jax.random.split(key, 3)
    x = jax.random.normal(kx, (B, N, C, H), dtype=jnp.float32) * 2.0 + 0.5
    # nn.BatchNorm2d default init is gamma=1, beta=0; perturb deterministically
    # so the affine path is actually exercised.
    gamma = 1.0 + 0.1 * jax.random.normal(kg, (H,), dtype=jnp.float32)
    beta = 0.1 * jax.random.normal(kb, (H,), dtype=jnp.float32)

    out = batch_norm_node(x, gamma, beta)
    out = jax.block_until_ready(out)

    ref = _reference(x, gamma, beta)
    assert out.shape == x.shape and out.dtype == x.dtype
    assert jnp.allclose(out, ref, rtol=1e-5, atol=1e-5), "mismatch vs reference"

    print("KERNEL_OK")
</pallas_src>

<mosaic_0001>
module attributes {stable_mosaic.version = 11 : i64} {
  func.func @_stats_kernel(%arg0: i32, %arg1: i32, %arg2: memref<16x128xf32, #tpu.memory_space<vmem>>, %arg3: memref<1x8x128xf32, #tpu.memory_space<vmem>>, %arg4: memref<1x8x128xf32, #tpu.memory_space<vmem>>) attributes {dimension_semantics = [#tpu.dimension_semantics<parallel>, #tpu.dimension_semantics<arbitrary>], iteration_bounds = array<i64: 1, 1>, scalar_prefetch = 0 : i64, scratch_operands = 0 : i64, tpu.core_type = #tpu.core_type<tc>, window_params = [{transform_indices = @transform_0, window_bounds = array<i64: 16, 128>}, {transform_indices = @transform_1, window_bounds = array<i64: 1, 8, 128>}, {transform_indices = @transform_2, window_bounds = array<i64: 1, 8, 128>}]} {
    %c0_i32 = arith.constant 0 : i32
    %0 = arith.cmpi eq, %arg1, %c0_i32 : i32
    %1 = arith.extui %0 : i1 to i32
    %c0_i32_0 = arith.constant 0 : i32
    %2 = arith.cmpi ne, %1, %c0_i32_0 : i32
    scf.if %2 {
      %cst_15 = arith.constant 0.000000e+00 : f32
      %16 = vector.broadcast %cst_15 : f32 to vector<1x8x128xf32>
      %c0_16 = arith.constant 0 : index
      %c0_17 = arith.constant 0 : index
      %c0_18 = arith.constant 0 : index
      %17 = vector.load %arg3[%c0_16, %c0_17, %c0_18] : memref<1x8x128xf32, #tpu.memory_space<vmem>>, vector<1x8x128xf32>
      tpu.vector_store %arg3[%c0_16, %c0_17, %c0_18], %16 {strides = array<i32>} : memref<1x8x128xf32, #tpu.memory_space<vmem>>, vector<1x8x128xf32>,
      %cst_19 = arith.constant 0.000000e+00 : f32
      %18 = vector.broadcast %cst_19 : f32 to vector<1x8x128xf32>
      %c0_20 = arith.constant 0 : index
      %c0_21 = arith.constant 0 : index
      %c0_22 = arith.constant 0 : index
      %19 = vector.load %arg4[%c0_20, %c0_21, %c0_22] : memref<1x8x128xf32, #tpu.memory_space<vmem>>, vector<1x8x128xf32>
      tpu.vector_store %arg4[%c0_20, %c0_21, %c0_22], %18 {strides = array<i32>} : memref<1x8x128xf32, #tpu.memory_space<vmem>>, vector<1x8x128xf32>,
    } else {
    }
    %c0 = arith.constant 0 : index
    %c0_1 = arith.constant 0 : index
    %3 = vector.load %arg2[%c0, %c0_1] : memref<16x128xf32, #tpu.memory_space<vmem>>, vector<16x128xf32>
    %4 = vector.shape_cast %3 : vector<16x128xf32> to vector<2x8x128xf32>
    %c0_2 = arith.constant 0 : index
    %c0_3 = arith.constant 0 : index
    %c0_4 = arith.constant 0 : index
    %5 = vector.load %arg3[%c0_2, %c0_3, %c0_4] : memref<1x8x128xf32, #tpu.memory_space<vmem>>, vector<1x8x128xf32>
    %cst = arith.constant dense<0.000000e+00> : vector<8x128xf32>
    %6 = vector.multi_reduction <add>, %4, %cst [0] : vector<2x8x128xf32> to vector<8x128xf32>
    %7 = vector.shape_cast %6 : vector<8x128xf32> to vector<1x8x128xf32>
    %8 = arith.addf %5, %7 : vector<1x8x128xf32>
    %c0_5 = arith.constant 0 : index
    %c0_6 = arith.constant 0 : index
    %c0_7 = arith.constant 0 : index
    %9 = vector.load %arg3[%c0_5, %c0_6, %c0_7] : memref<1x8x128xf32, #tpu.memory_space<vmem>>, vector<1x8x128xf32>
    tpu.vector_store %arg3[%c0_5, %c0_6, %c0_7], %8 {strides = array<i32>} : memref<1x8x128xf32, #tpu.memory_space<vmem>>, vector<1x8x128xf32>,
    %c0_8 = arith.constant 0 : index
    %c0_9 = arith.constant 0 : index
    %c0_10 = arith.constant 0 : index
    %10 = vector.load %arg4[%c0_8, %c0_9, %c0_10] : memref<1x8x128xf32, #tpu.memory_space<vmem>>, vector<1x8x128xf32>
    %11 = arith.mulf %4, %4 : vector<2x8x128xf32>
    %cst_11 = arith.constant dense<0.000000e+00> : vector<8x128xf32>
    %12 = vector.multi_reduction <add>, %11, %cst_11 [0] : vector<2x8x128xf32> to vector<8x128xf32>
    %13 = vector.shape_cast %12 : vector<8x128xf32> to vector<1x8x128xf32>
    %14 = arith.addf %10, %13 : vector<1x8x128xf32>
    %c0_12 = arith.constant 0 : index
    %c0_13 = arith.constant 0 : index
    %c0_14 = arith.constant 0 : index
    %15 = vector.load %arg4[%c0_12, %c0_13, %c0_14] : memref<1x8x128xf32, #tpu.memory_space<vmem>>, vector<1x8x128xf32>
    tpu.vector_store %arg4[%c0_12, %c0_13, %c0_14], %14 {strides = array<i32>} : memref<1x8x128xf32, #tpu.memory_space<vmem>>, vector<1x8x128xf32>,
    return
  }
  func.func @transform_0(%arg0: i32, %arg1: i32) -> (i32, i32) {
    %c1_i32 = arith.constant 1 : i32
    %0 = arith.muli %arg0, %c1_i32 : i32
    %1 = arith.addi %0, %arg1 : i32
    %c0_i32 = arith.constant 0 : i32
    %c0_i32_0 = arith.constant 0 : i32
    return %1, %c0_i32 : i32, i32
  }
  func.func @transform_1(%arg0: i32, %arg1: i32) -> (i32, i32, i32) {
    %c0_i32 = arith.constant 0 : i32
    %c0_i32_0 = arith.constant 0 : i32
    %c0_i32_1 = arith.constant 0 : i32
    return %arg0, %c0_i32, %c0_i32_0 : i32, i32, i32
  }
  func.func @transform_2(%arg0: i32, %arg1: i32) -> (i32, i32, i32) {
    %c0_i32 = arith.constant 0 : i32
    %c0_i32_0 = arith.constant 0 : i32
    %c0_i32_1 = arith.constant 0 : i32
    return %arg0, %c0_i32, %c0_i32_0 : i32, i32, i32
  }
}

</mosaic_0001>

<llo_original>
// kernel: tpu_custom_call.1
$region0: #{tpu_custom_call.1}
  #allocation0 [shape = 'u32[]', space=smem, size = 0x4, offset = 0x4, fixed_abs, tag = 'smem constant byte address 0x4 - core index']
  #allocation1 [shape = 'u32[144,128]{1,0:T(1,128)}', space=vmem, size = 0x12000, scoped, tag = 'internal scratch']
  %s0 = inlined_call_operand.hbm [shape: f32[16,128], index: 0, kind: input, shape index: {}]
  %s1 = inlined_call_operand.hbm [shape: f32[1,8,128], index: 1, kind: output, shape index: {0}]
  %s2 = inlined_call_operand.hbm [shape: f32[1,8,128], index: 2, kind: output, shape index: {1}]
  %3 = xla_tuple %s1, %s2
  %s4 = sld [smem:[#allocation0]]
  $region30: #{tpu_custom_call.1} parent=0
    _
  %s6 = ssub.s32 1, %s4
  %s7 = scalar_select 0, %s6, %s4
  $region1: #{tpu_custom_call.1} parent=0
    #allocation2 [shape = 'u8[8192]{0}', space=vmem, size = 0x2000, scoped, tag = 'input window, operand 0, single buffered']
    #allocation3 [shape = 's32[1]{0}', space=sflag, size = 0x4, scoped, tag = 'scoped memory for tpu_custom_call.1']
    #allocation4 [shape = 's32[1]{0}', space=sflag, size = 0x4, scoped, tag = 'scoped memory for tpu_custom_call.1']
    #allocation5 [shape = 'u8[4096]{0}', space=vmem, size = 0x1000, scoped, tag = 'output window, operand 0, single buffered']
    #allocation6 [shape = 'u8[4096]{0}', space=vmem, size = 0x1000, scoped, tag = 'output window, operand 1, single buffered']
    #allocation7 [shape = 's32[1]{0}', space=sflag, size = 0x4, scoped, tag = 'scoped memory for tpu_custom_call.1']
    %8 = vsyncpa [#allocation3], 0
    %9 = vsyncpa [#allocation4], 0
    %10 = vsyncpa [#allocation7], 0
    // Predicated region
    $region2: #{tpu_custom_call.1} parent=1 // pred_check
      _
    $region3: #{tpu_custom_call.1} parent=1 // pred_check_branch
      %12 = sbr.rel (0) target = $region5
    $region4: #{tpu_custom_call.1} parent=1 // pred_region
      %s13 = sadd.s32 0, 0
      %s14 = smul.u32 2, %s13
      %s16 = ssub.s32 256, 256
      %17 = vsyncadd [#allocation3], %s16
      %s18 = smul.addr %s14, 128
      %s19 = scalar_lea.hbm %s0, %s18
      %s20 = sshll.u32 [#allocation2], 4
      %s21 = int_to_ptr.vmem [resolvable:$true] %s20
      %26 = dma.hbm_to_vmem [thread:$0]  %s19, 256, %s21, [#allocation3], 128, 128, 8
    $region5: #{tpu_custom_call.1} parent=1 // pred_fallthru
      _
    // Predicated region
    $region6: #{tpu_custom_call.1} parent=1 // pred_check
      _
    $region7: #{tpu_custom_call.1} parent=1 // pred_check_branch
      %28 = sbr.rel (0) target = $region9
    $region8: #{tpu_custom_call.1} parent=1 // pred_region
      %29 = dma.done [#allocation3], 256
    $region9: #{tpu_custom_call.1} parent=1 // pred_fallthru
      _
    %s30 = sadd.s32 0, 0
    %s31 = smul.u32 2, %s30
    %p32 = scmp.eq.s32.totalorder 0, 0
    // Predicated region
    $region10: #{tpu_custom_call.1} parent=1 // pred_check
      %p33 = pneg %p32
    $region11: #{tpu_custom_call.1} parent=1 // pred_check_branch
      %35 = sbr.rel (%p33) target = $region13
    $region12: #{tpu_custom_call.1} parent=1 // pred_region
      %36 = vst [vmem:[#allocation5] sm:$0xff] 0.0
      %37 = vst [vmem:[#allocation6] sm:$0xff] 0.0
    $region13: #{tpu_custom_call.1} parent=1 // pred_fallthru
      _
    %v38 = vld [vmem:[#allocation2] sm:$0xff]
    %v39 = vld [vmem:[#allocation2 + $0x8] sm:$0xff]
    %v40 = vld [vmem:[#allocation5] sm:$0xff]
    %v41 = vadd.f32 %v38, %v39
    %v42 = vadd.f32 %v40, %v41
    %43 = vst [vmem:[#allocation5] sm:$0xff] %v42
    %v44 = vld [vmem:[#allocation6] sm:$0xff]
    %v45 = vmul.f32 %v38, %v38
    %v46 = vmul.f32 %v39, %v39
    %v47 = vadd.f32 %v45, %v46
    %v48 = vadd.f32 %v44, %v47
    %49 = vst [vmem:[#allocation6] sm:$0xff] %v48
    // Predicated region
    $region14: #{tpu_custom_call.1} parent=1 // pred_check
      _
    $region15: #{tpu_custom_call.1} parent=1 // pred_check_branch
      %51 = sbr.rel (0) target = $region17
    $region16: #{tpu_custom_call.1} parent=1 // pred_region
      %s53 = ssub.s32 128, 128
      %54 = vsyncadd [#allocation4], %s53
      %s56 = sshll.u32 [#allocation5], 4
      %s57 = int_to_ptr.vmem [resolvable:$true] %s56
      %59 = dma.vmem_to_hbm [thread:$0]  %s57, 128, %s1, [#allocation4]
    $region17: #{tpu_custom_call.1} parent=1 // pred_fallthru
      _
    // Predicated region
    $region18: #{tpu_custom_call.1} parent=1 // pred_check
      _
    $region19: #{tpu_custom_call.1} parent=1 // pred_check_branch
      %61 = sbr.rel (0) target = $region21
    $region20: #{tpu_custom_call.1} parent=1 // pred_region
      %s63 = ssub.s32 128, 128
      %64 = vsyncadd [#allocation7], %s63
      %s66 = sshll.u32 [#allocation6], 4
      %s67 = int_to_ptr.vmem [resolvable:$true] %s66
      %69 = dma.vmem_to_hbm [thread:$0]  %s67, 128, %s2, [#allocation7]
    $region21: #{tpu_custom_call.1} parent=1 // pred_fallthru
      _
    // Predicated region
    $region22: #{tpu_custom_call.1} parent=1 // pred_check
      _
    $region23: #{tpu_custom_call.1} parent=1 // pred_check_branch
      %71 = sbr.rel (0) target = $region25
    $region24: #{tpu_custom_call.1} parent=1 // pred_region
      %72 = dma.done [#allocation4], 128
    $region25: #{tpu_custom_call.1} parent=1 // pred_fallthru
      _
    // Predicated region
    $region26: #{tpu_custom_call.1} parent=1 // pred_check
      _
    $region27: #{tpu_custom_call.1} parent=1 // pred_check_branch
      %74 = sbr.rel (0) target = $region29
    $region28: #{tpu_custom_call.1} parent=1 // pred_region
      %75 = dma.done [#allocation7], 128
    $region29: #{tpu_custom_call.1} parent=1 // pred_fallthru
      _
    %76 = vsyncpa [#allocation3], 1
    %77 = vsyncpa [#allocation4], 1
    %78 = vsyncpa [#allocation7], 1

</llo_original>
